<compile_context>
chip_gen: v6e
topology: v6e:2x2x1
jax: 0.10.0
libtpu: 0.0.40
codegen_flags: <defaults>
</compile_context>

<pallas_src>
import jax
import jax.numpy as jnp
from jax.experimental import pallas as pl
from jax.experimental.pallas import tpu as pltpu


def _make_unpool_kernel(N, M, K, TM, D, total, group):
    """Build the fused pass-through + gather kernel (all sizes are static)."""
    num_tiles = -(-total // TM)
    boundary = N // TM                      # tile containing the old/new seam
    old_in_boundary = N - boundary * TM     # old rows inside the boundary tile
    n_new_boundary = min(TM - old_in_boundary, M)
    last = num_tiles - 1

    def gather_row(idx_ref, feat_ref, j):
        """0.5 * sum_k feat[pool_idx[j, k]]  ->  (1, D) float32."""
        base = j * K
        acc = feat_ref[pl.ds(idx_ref[base], 1), :].astype(jnp.float32)
        for k in range(1, K):               # K is tiny (2 for edge midpoints)
            acc = acc + feat_ref[pl.ds(idx_ref[base + k], 1), :].astype(jnp.float32)
        return 0.5 * acc

    def gather_store(idx_ref, feat_ref, out_ref, out_row0, new0, count):
        """Write `count` new-vertex rows at local rows [out_row0, out_row0+count).

        `count` and `out_row0` are Python ints; `new0` (first new-vertex id)
        may be a dynamic scalar.  Rows are emitted in batches of `group` so the
        output stores are sublane-dense instead of 1-row masked stores.
        """
        if count <= 0:
            return
        n_groups, rem = divmod(count, group)

        def emit_group(g, width):
            rows = [gather_row(idx_ref, feat_ref, new0 + g * group + r)
                    for r in range(width)]
            block = rows[0] if width == 1 else jnp.concatenate(rows, axis=0)
            start = out_row0 + g * group
            if not isinstance(start, int) and (out_row0 % group == 0):
                start = pl.multiple_of(start, group)   # sublane-aligned store
            out_ref[pl.ds(start, width), :] = block.astype(out_ref.dtype)

        if n_groups > 0:
            if n_groups <= 4:
                for g in range(n_groups):              # fully static indices
                    emit_group(g, group)
            else:
                def body(g, carry):
                    emit_group(g, group)
                    return carry
                jax.lax.fori_loop(0, n_groups, body, 0, unroll=2)
        if rem > 0:
            emit_group(n_groups, rem)

    def kernel(idx_ref, feat_ref, out_ref):
        i = pl.program_id(0)

        # --- tiles fully inside the pass-through region [0, N) ---------------
        if boundary > 0:                    # only exists when N >= TM
            @pl.when(i < boundary)
            def _():
                src = pl.multiple_of(i * TM, 8)        # TM is a multiple of 8
                out_ref[...] = feat_ref[pl.ds(src, TM), :]

        # --- the statically specialized boundary tile ------------------------
        @pl.when(i == boundary)
        def _():
            src0 = boundary * TM                       # static
            p8 = (old_in_boundary // 8) * 8            # 8-aligned old prefix
            rem_old = old_in_boundary - p8
            if p8 > 0:
                out_ref[pl.ds(0, p8), :] = feat_ref[pl.ds(src0, p8), :]
            if rem_old > 0:
                out_ref[pl.ds(p8, rem_old), :] = feat_ref[pl.ds(src0 + p8, rem_old), :]
            gather_store(idx_ref, feat_ref, out_ref,
                         out_row0=old_in_boundary, new0=0,
                         count=n_new_boundary)

        # --- tiles strictly past the boundary: all-new rows ------------------
        if last > boundary:
            if last > boundary + 1:         # full "middle" gather tiles exist
                @pl.when(jnp.logical_and(i > boundary, i < last))
                def _():
                    gather_store(idx_ref, feat_ref, out_ref,
                                 out_row0=0, new0=i * TM - N, count=TM)

            @pl.when(i == last)             # static new0 / count for last tile
            def _():
                gather_store(idx_ref, feat_ref, out_ref,
                             out_row0=0, new0=last * TM - N,
                             count=total - last * TM)

    return kernel


def deformation_unpool(feat: jax.Array, pool_idx: jax.Array) -> jax.Array:
    """h = concat([feat, 0.5 * sum(feat[pool_idx], axis=1)], axis=0), fused."""
    N, D = feat.shape
    M, K = pool_idx.shape
    if M == 0:
        return feat
    total = N + M
    itemsize = jnp.dtype(feat.dtype).itemsize

    # Output row-tile: big enough to amortize the ~0.35us grid-step overhead
    # and approach the HBM roofline on pass-through tiles; >= 2 tiles so both
    # v7x TensorCores get work; multiple of 8 (or full extent) for dense tiles.
    if total > 2048:
        TM = 1024
    elif total >= 16:
        TM = (((total + 1) // 2) + 7) // 8 * 8         # ~half, rounded up to 8
    else:
        TM = total                                     # tiny mesh: single tile
    num_tiles = -(-total // TM)

    # Rows per batched gather store: one full (8,128) f32 vreg, 16 rows for
    # 16-bit dtypes (sublane-packed), etc.
    group = max(8, 32 // itemsize)

    # Only the M*K parent indices go to SMEM (no padded per-output-row table).
    idx_flat = pool_idx.reshape(-1).astype(jnp.int32)

    kernel = _make_unpool_kernel(N, M, K, TM, D, total, group)

    # feat is VMEM-resident with a constant block index -> single-buffered.
    try:
        feat_spec = pl.BlockSpec((N, D), lambda i, idx: (0, 0),
                                 pipeline_mode=pl.Buffered(1))
    except (TypeError, AttributeError):     # older jax without pipeline_mode
        feat_spec = pl.BlockSpec((N, D), lambda i, idx: (0, 0))

    grid_spec = pltpu.PrefetchScalarGridSpec(
        num_scalar_prefetch=1,              # idx_flat lands in SMEM
        grid=(num_tiles,),
        in_specs=[feat_spec],
        out_specs=pl.BlockSpec((TM, D), lambda i, idx: (i, 0)),
    )

    # Per-generation VMEM budget: actual capacity minus headroom for compiler
    # scratch (avoids both the too-tight v7x 64 MiB clamp and under-using the
    # 128 MiB on v5e/v6e).
    try:
        vmem_cap = int(pltpu.get_tpu_info().vmem_capacity_bytes)
    except Exception:
        vmem_cap = 64 << 20                 # v7x per-TC VMEM (smallest case)
    vmem_ceiling = vmem_cap - (vmem_cap // 8)
    vmem_needed = N * D * itemsize + 2 * TM * D * itemsize + (2 << 20)
    vmem_limit = int(min(max(vmem_needed, 32 << 20), vmem_ceiling))

    cost = pl.CostEstimate(
        flops=int(M * (K + 1) * D),
        transcendentals=0,
        bytes_accessed=int((N + M * K + total) * D * itemsize + 4 * M * K),
    )

    return pl.pallas_call(
        kernel,
        out_shape=jax.ShapeDtypeStruct((total, D), feat.dtype),
        grid_spec=grid_spec,
        compiler_params=pltpu.CompilerParams(
            dimension_semantics=("parallel",),   # independent output tiles
            vmem_limit_bytes=vmem_limit,
        ),
        cost_estimate=cost,
    )(idx_flat, feat)


def _reference(feat, pool_idx):
    new_vs = 0.5 * jnp.sum(feat[pool_idx], axis=1)
    return jnp.concatenate([feat, new_vs], axis=0)


if __name__ == "__main__":
    key = jax.random.PRNGKey(0)
    ks = jax.random.split(key, 6)
    D, K = 128, 2

    # 1) tiny mesh: pass-through tile + boundary tile with a non-8-aligned
    #    old-row remainder and a partial last output block.
    N1, M1 = 20, 8
    feat1 = jax.random.normal(ks[0], (N1, D), dtype=jnp.float32)
    idx1 = jax.random.randint(ks[1], (M1, K), 0, N1, dtype=jnp.int32)
    h1 = deformation_unpool(feat1, idx1)
    jax.block_until_ready(h1)
    assert h1.shape == (N1 + M1, D), h1.shape
    assert jnp.allclose(h1, _reference(feat1, idx1), atol=1e-5, rtol=1e-5)

    # 2) pass-through-dominated mesh: bulk-copy tile + specialized boundary tile.
    N2, M2 = 600, 8
    feat2 = jax.random.normal(ks[2], (N2, D), dtype=jnp.float32)
    idx2 = jax.random.randint(ks[3], (M2, K), 0, N2, dtype=jnp.int32)
    h2 = deformation_unpool(feat2, idx2)
    jax.block_until_ready(h2)
    assert h2.shape == (N2 + M2, D), h2.shape
    assert jnp.allclose(h2, _reference(feat2, idx2), atol=1e-5, rtol=1e-5)

    # 3) gather-dominated mesh: exercises middle full-gather tiles (dynamic
    #    start), the batched fori_loop group path, the <8-row remainder group
    #    and a partial last block (N+M not a multiple of TM).
    N3, M3 = 64, 2300
    feat3 = jax.random.normal(ks[4], (N3, D), dtype=jnp.float32)
    idx3 = jax.random.randint(ks[5], (M3, K), 0, N3, dtype=jnp.int32)
    h3 = deformation_unpool(feat3, idx3)
    jax.block_until_ready(h3)
    assert h3.shape == (N3 + M3, D), h3.shape
    assert jnp.allclose(h3, _reference(feat3, idx3), atol=1e-5, rtol=1e-5)

    print("KERNEL_OK")
</pallas_src>

<mosaic_0001>
module attributes {stable_mosaic.version = 11 : i64} {
  func.func @kernel(%arg0: i32, %arg1: memref<16xi32, #tpu.memory_space<smem>>, %arg2: memref<20x128xf32, #tpu.memory_space<vmem>>, %arg3: memref<16x128xf32, #tpu.memory_space<vmem>>) attributes {dimension_semantics = [#tpu.dimension_semantics<parallel>], iteration_bounds = array<i64: 2>, scalar_prefetch = 1 : i64, scratch_operands = 0 : i64, tpu.core_type = #tpu.core_type<tc>, window_params = [{pipeline_mode = #tpu.pipeline_mode<synchronous>, transform_indices = @transform_0, window_bounds = array<i64: 20, 128>}, {transform_indices = @transform_1, window_bounds = array<i64: 16, 128>}]} {
    %c1_i32 = arith.constant 1 : i32
    %0 = arith.cmpi slt, %arg0, %c1_i32 : i32
    %1 = arith.extui %0 : i1 to i32
    %c0_i32 = arith.constant 0 : i32
    %2 = arith.cmpi ne, %1, %c0_i32 : i32
    scf.if %2 {
      %c16_i32 = arith.constant 16 : i32
      %6 = arith.muli %arg0, %c16_i32 : i32
      %7 = tpu.assume_multiple %6, 8 : i32
      %8 = arith.index_cast %7 : i32 to index
      %c0 = arith.constant 0 : index
      %9 = vector.load %arg2[%8, %c0] : memref<20x128xf32, #tpu.memory_space<vmem>>, vector<16x128xf32>
      %c0_2 = arith.constant 0 : index
      %c0_3 = arith.constant 0 : index
      %10 = vector.load %arg3[%c0_2, %c0_3] : memref<16x128xf32, #tpu.memory_space<vmem>>, vector<16x128xf32>
      tpu.vector_store %arg3[%c0_2, %c0_3], %9 {strides = array<i32>} : memref<16x128xf32, #tpu.memory_space<vmem>>, vector<16x128xf32>,
    } else {
    }
    %c1_i32_0 = arith.constant 1 : i32
    %3 = arith.cmpi eq, %arg0, %c1_i32_0 : i32
    %4 = arith.extui %3 : i1 to i32
    %c0_i32_1 = arith.constant 0 : i32
    %5 = arith.cmpi ne, %4, %c0_i32_1 : i32
    scf.if %5 {
      %c16 = arith.constant 16 : index
      %c0 = arith.constant 0 : index
      %6 = vector.load %arg2[%c16, %c0] : memref<20x128xf32, #tpu.memory_space<vmem>>, vector<4x128xf32>
      %c0_2 = arith.constant 0 : index
      %c0_3 = arith.constant 0 : index
      %7 = vector.load %arg3[%c0_2, %c0_3] : memref<16x128xf32, #tpu.memory_space<vmem>>, vector<4x128xf32>
      tpu.vector_store %arg3[%c0_2, %c0_3], %6 {strides = array<i32>} : memref<16x128xf32, #tpu.memory_space<vmem>>, vector<4x128xf32>,
      %c0_4 = arith.constant 0 : index
      %8 = memref.load %arg1[%c0_4] : memref<16xi32, #tpu.memory_space<smem>>
      %9 = arith.index_cast %8 : i32 to index
      %c0_5 = arith.constant 0 : index
      %10 = vector.load %arg2[%9, %c0_5] : memref<20x128xf32, #tpu.memory_space<vmem>>, vector<1x128xf32>
      %c1 = arith.constant 1 : index
      %11 = memref.load %arg1[%c1] : memref<16xi32, #tpu.memory_space<smem>>
      %12 = arith.index_cast %11 : i32 to index
      %c0_6 = arith.constant 0 : index
      %13 = vector.load %arg2[%12, %c0_6] : memref<20x128xf32, #tpu.memory_space<vmem>>, vector<1x128xf32>
      %14 = arith.addf %10, %13 : vector<1x128xf32>
      %cst = arith.constant 5.000000e-01 : f32
      %15 = vector.broadcast %cst : f32 to vector<1x128xf32>
      %16 = arith.mulf %15, %14 : vector<1x128xf32>
      %c2 = arith.constant 2 : index
      %17 = memref.load %arg1[%c2] : memref<16xi32, #tpu.memory_space<smem>>
      %18 = arith.index_cast %17 : i32 to index
      %c0_7 = arith.constant 0 : index
      %19 = vector.load %arg2[%18, %c0_7] : memref<20x128xf32, #tpu.memory_space<vmem>>, vector<1x128xf32>
      %c3 = arith.constant 3 : index
      %20 = memref.load %arg1[%c3] : memref<16xi32, #tpu.memory_space<smem>>
      %21 = arith.index_cast %20 : i32 to index
      %c0_8 = arith.constant 0 : index
      %22 = vector.load %arg2[%21, %c0_8] : memref<20x128xf32, #tpu.memory_space<vmem>>, vector<1x128xf32>
      %23 = arith.addf %19, %22 : vector<1x128xf32>
      %cst_9 = arith.constant 5.000000e-01 : f32
      %24 = vector.broadcast %cst_9 : f32 to vector<1x128xf32>
      %25 = arith.mulf %24, %23 : vector<1x128xf32>
      %c4 = arith.constant 4 : index
      %26 = memref.load %arg1[%c4] : memref<16xi32, #tpu.memory_space<smem>>
      %27 = arith.index_cast %26 : i32 to index
      %c0_10 = arith.constant 0 : index
      %28 = vector.load %arg2[%27, %c0_10] : memref<20x128xf32, #tpu.memory_space<vmem>>, vector<1x128xf32>
      %c5 = arith.constant 5 : index
      %29 = memref.load %arg1[%c5] : memref<16xi32, #tpu.memory_space<smem>>
      %30 = arith.index_cast %29 : i32 to index
      %c0_11 = arith.constant 0 : index
      %31 = vector.load %arg2[%30, %c0_11] : memref<20x128xf32, #tpu.memory_space<vmem>>, vector<1x128xf32>
      %32 = arith.addf %28, %31 : vector<1x128xf32>
      %cst_12 = arith.constant 5.000000e-01 : f32
      %33 = vector.broadcast %cst_12 : f32 to vector<1x128xf32>
      %34 = arith.mulf %33, %32 : vector<1x128xf32>
      %c6 = arith.constant 6 : index
      %35 = memref.load %arg1[%c6] : memref<16xi32, #tpu.memory_space<smem>>
      %36 = arith.index_cast %35 : i32 to index
      %c0_13 = arith.constant 0 : index
      %37 = vector.load %arg2[%36, %c0_13] : memref<20x128xf32, #tpu.memory_space<vmem>>, vector<1x128xf32>
      %c7 = arith.constant 7 : index
      %38 = memref.load %arg1[%c7] : memref<16xi32, #tpu.memory_space<smem>>
      %39 = arith.index_cast %38 : i32 to index
      %c0_14 = arith.constant 0 : index
      %40 = vector.load %arg2[%39, %c0_14] : memref<20x128xf32, #tpu.memory_space<vmem>>, vector<1x128xf32>
      %41 = arith.addf %37, %40 : vector<1x128xf32>
      %cst_15 = arith.constant 5.000000e-01 : f32
      %42 = vector.broadcast %cst_15 : f32 to vector<1x128xf32>
      %43 = arith.mulf %42, %41 : vector<1x128xf32>
      %c8 = arith.constant 8 : index
      %44 = memref.load %arg1[%c8] : memref<16xi32, #tpu.memory_space<smem>>
      %45 = arith.index_cast %44 : i32 to index
      %c0_16 = arith.constant 0 : index
      %46 = vector.load %arg2[%45, %c0_16] : memref<20x128xf32, #tpu.memory_space<vmem>>, vector<1x128xf32>
      %c9 = arith.constant 9 : index
      %47 = memref.load %arg1[%c9] : memref<16xi32, #tpu.memory_space<smem>>
      %48 = arith.index_cast %47 : i32 to index
      %c0_17 = arith.constant 0 : index
      %49 = vector.load %arg2[%48, %c0_17] : memref<20x128xf32, #tpu.memory_space<vmem>>, vector<1x128xf32>
      %50 = arith.addf %46, %49 : vector<1x128xf32>
      %cst_18 = arith.constant 5.000000e-01 : f32
      %51 = vector.broadcast %cst_18 : f32 to vector<1x128xf32>
      %52 = arith.mulf %51, %50 : vector<1x128xf32>
      %c10 = arith.constant 10 : index
      %53 = memref.load %arg1[%c10] : memref<16xi32, #tpu.memory_space<smem>>
      %54 = arith.index_cast %53 : i32 to index
      %c0_19 = arith.constant 0 : index
      %55 = vector.load %arg2[%54, %c0_19] : memref<20x128xf32, #tpu.memory_space<vmem>>, vector<1x128xf32>
      %c11 = arith.constant 11 : index
      %56 = memref.load %arg1[%c11] : memref<16xi32, #tpu.memory_space<smem>>
      %57 = arith.index_cast %56 : i32 to index
      %c0_20 = arith.constant 0 : index
      %58 = vector.load %arg2[%57, %c0_20] : memref<20x128xf32, #tpu.memory_space<vmem>>, vector<1x128xf32>
      %59 = arith.addf %55, %58 : vector<1x128xf32>
      %cst_21 = arith.constant 5.000000e-01 : f32
      %60 = vector.broadcast %cst_21 : f32 to vector<1x128xf32>
      %61 = arith.mulf %60, %59 : vector<1x128xf32>
      %c12 = arith.constant 12 : index
      %62 = memref.load %arg1[%c12] : memref<16xi32, #tpu.memory_space<smem>>
      %63 = arith.index_cast %62 : i32 to index
      %c0_22 = arith.constant 0 : index
      %64 = vector.load %arg2[%63, %c0_22] : memref<20x128xf32, #tpu.memory_space<vmem>>, vector<1x128xf32>
      %c13 = arith.constant 13 : index
      %65 = memref.load %arg1[%c13] : memref<16xi32, #tpu.memory_space<smem>>
      %66 = arith.index_cast %65 : i32 to index
      %c0_23 = arith.constant 0 : index
      %67 = vector.load %arg2[%66, %c0_23] : memref<20x128xf32, #tpu.memory_space<vmem>>, vector<1x128xf32>
      %68 = arith.addf %64, %67 : vector<1x128xf32>
      %cst_24 = arith.constant 5.000000e-01 : f32
      %69 = vector.broadcast %cst_24 : f32 to vector<1x128xf32>
      %70 = arith.mulf %69, %68 : vector<1x128xf32>
      %c14 = arith.constant 14 : index
      %71 = memref.load %arg1[%c14] : memref<16xi32, #tpu.memory_space<smem>>
      %72 = arith.index_cast %71 : i32 to index
      %c0_25 = arith.constant 0 : index
      %73 = vector.load %arg2[%72, %c0_25] : memref<20x128xf32, #tpu.memory_space<vmem>>, vector<1x128xf32>
      %c15 = arith.constant 15 : index
      %74 = memref.load %arg1[%c15] : memref<16xi32, #tpu.memory_space<smem>>
      %75 = arith.index_cast %74 : i32 to index
      %c0_26 = arith.constant 0 : index
      %76 = vector.load %arg2[%75, %c0_26] : memref<20x128xf32, #tpu.memory_space<vmem>>, vector<1x128xf32>
      %77 = arith.addf %73, %76 : vector<1x128xf32>
      %cst_27 = arith.constant 5.000000e-01 : f32
      %78 = vector.broadcast %cst_27 : f32 to vector<1x128xf32>
      %79 = arith.mulf %78, %77 : vector<1x128xf32>
      %80 = tpu.concatenate %16, %25, %34, %43, %52, %61, %70, %79 in 0 : vector<1x128xf32>, vector<1x128xf32>, vector<1x128xf32>, vector<1x128xf32>, vector<1x128xf32>, vector<1x128xf32>, vector<1x128xf32>, vector<1x128xf32> -> vector<8x128xf32>
      %c4_28 = arith.constant 4 : index
      %c0_29 = arith.constant 0 : index
      %81 = vector.load %arg3[%c4_28, %c0_29] : memref<16x128xf32, #tpu.memory_space<vmem>>, vector<8x128xf32>
      tpu.vector_store %arg3[%c4_28, %c0_29], %80 {strides = array<i32>} : memref<16x128xf32, #tpu.memory_space<vmem>>, vector<8x128xf32>,
    } else {
    }
    return
  }
  func.func @transform_0(%arg0: i32, %arg1: memref<16xi32, #tpu.memory_space<smem>>) -> (i32, i32) {
    %c0_i32 = arith.constant 0 : i32
    %c0_i32_0 = arith.constant 0 : i32
    %c0_i32_1 = arith.constant 0 : i32
    return %c0_i32, %c0_i32_0 : i32, i32
  }
  func.func @transform_1(%arg0: i32, %arg1: memref<16xi32, #tpu.memory_space<smem>>) -> (i32, i32) {
    %c0_i32 = arith.constant 0 : i32
    %c0_i32_0 = arith.constant 0 : i32
    return %arg0, %c0_i32 : i32, i32
  }
}

</mosaic_0001>

<llo_original>
// kernel: tpu_custom_call.1
$region0: #{tpu_custom_call.1}
  #allocation0 [shape = 'u32[]', space=smem, size = 0x4, offset = 0x4, fixed_abs, tag = 'smem constant byte address 0x4 - core index']
  #allocation1 [shape = 'u32[144,128]{1,0:T(1,128)}', space=vmem, size = 0x12000, scoped, tag = 'internal scratch']
  #allocation2 [shape = 's32[1]{0}', space=sflag, size = 0x4, scoped, tag = 'scoped memory for tpu_custom_call.1']
  #allocation3 [shape = 'u8[512]{0}', space=smem, size = 0x200, scoped, tag = 'prefetched SMEM operand 0']
  %s0 = inlined_call_operand.hbm [shape: s32[16], index: 0, kind: input, shape index: {}]
  %s1 = inlined_call_operand.hbm [shape: f32[20,128], index: 1, kind: input, shape index: {}]
  %s2 = inlined_call_operand.hbm [shape: f32[28,128], index: 2, kind: output, shape index: {}]
  %s3 = sld [smem:[#allocation0]]
  $region49: #{tpu_custom_call.1} parent=0
    _
  %s5 = ssub.s32 1, %s3
  %s6 = scalar_select 0, %s5, %s3
  %8 = dma.hbm_to_smem %s0, 16, [#allocation3], [#allocation2]
  %9 = dma.done [#allocation2], 16
  %10 = sfence
  $region1: #{tpu_custom_call.1} parent=0
    #allocation4 [shape = 'u8[12288]{0}', space=vmem, size = 0x3000, scoped, tag = 'input window, operand 1, single buffered']
    #allocation5 [shape = 's32[2]{0}', space=sflag, size = 0x8, scoped, tag = 'scoped memory for tpu_custom_call.1']
    #allocation6 [shape = 's32[2]{0}', space=sflag, size = 0x8, scoped, tag = 'scoped memory for tpu_custom_call.1']
    #allocation7 [shape = 'u8[16384]{0}', space=vmem, size = 0x4000, scoped, tag = 'output window, operand 0']
    %11 = vsyncpa [#allocation5], 0
    %12 = vsyncpa [#allocation6], 0
    %s13 = scalar_lea.sflag [#allocation6], 1
    %14 = vsyncpa %s13, 0
    loop: start=0, step=1, limit=4
    $region2: #{tpu_custom_call.1} parent=1 // loop_pre_header
      _
    $region3: #{tpu_custom_call.1} parent=1 // loop_header
      %s16 = sphi 0, %s20
      %p17 = scmp.ge.s32.totalorder %s16, 4
      %s24 = sphi 0, %s24
      %s26 = sphi 0, %s24
      %s27 = sphi 0, %s26
      %s41 = sphi 0, %s27
      %s47 = sphi 0, %s49
      %s50 = sphi 0, %s47
      %s51 = sphi 0, %s50
      %s67 = sphi 0, %s51
    $region4: #{tpu_custom_call.1} parent=1 // loop_header_branch
      %19 = sbr.rel (%p17) target = $region8
    $region5: #{tpu_custom_call.1} parent=1 // loop_body
      %s21 = ssub.s32 %s16, 1
      %s22 = ssub.s32 %s16, 2
      %s23 = sadd.s32 %s16, 1
      %s25 = sadd.s32 %s24, 1
      %p28 = scmp.eq.s32.totalorder %s16, 1
      %p29 = scmp.ne.s32.totalorder %s24, %s26
      %p30 = scmp.eq.s32.totalorder %s16, 0
      %p31 = por %p29, %p30
      %p32 = scmp.ne.s32.totalorder %s24, %s26
      %p33 = scmp.eq.s32.totalorder %s21, 1
      %p34 = por %p32, %p33
      %p35 = scmp.ne.s32.totalorder %s26, %s27
      %p36 = scmp.eq.s32.totalorder %s21, 0
      %p37 = por %p35, %p36
      %p38 = scmp.ne.s32.totalorder %s26, %s27
      %p39 = scmp.eq.s32.totalorder %s22, 1
      %p40 = por %p38, %p39
      %p42 = scmp.ne.s32.totalorder %s27, %s41
      %p43 = scmp.eq.s32.totalorder %s22, 0
      %p44 = por %p42, %p43
      %s45 = ssub.s32 %s16, %s23
      %p46 = scmp.eq.s32.totalorder %s45, 0
      %s48 = sadd.s32 %s47, 1
      %s49 = scalar_select %p46, %s47, %s48
      %p52 = pneg %p46
      %p53 = scmp.eq.s32.totalorder %s16, 1
      %p54 = por %p52, %p53
      %p55 = scmp.ne.s32.totalorder %s47, %s50
      %p56 = scmp.eq.s32.totalorder %s16, 0
      %p57 = por %p55, %p56
      %p58 = scmp.ne.s32.totalorder %s47, %s50
      %p59 = scmp.eq.s32.totalorder %s21, 1
      %p60 = por %p58, %p59
      %p61 = scmp.ne.s32.totalorder %s50, %s51
      %p62 = scmp.eq.s32.totalorder %s21, 0
      %p63 = por %p61, %p62
      %p64 = scmp.ne.s32.totalorder %s50, %s51
      %p65 = scmp.eq.s32.totalorder %s22, 1
      %p66 = por %p64, %p65
      %p68 = scmp.ne.s32.totalorder %s51, %s67
      %p69 = scmp.eq.s32.totalorder %s22, 0
      %p70 = por %p68, %p69
      %p71 = scmp.le.s32.totalorder 1, %s16
      %p72 = scmp.lt.s32.totalorder %s16, 3
      %p73 = pnand %p71, %p72
      %p74 = pneg %p73
      // Predicated region
      $region9: #{tpu_custom_call.1} parent=5 // pred_check
        _
      $region10: #{tpu_custom_call.1} parent=5 // pred_check_branch
        %76 = sbr.rel (%p73) target = $region12
      $region11: #{tpu_custom_call.1} parent=5 // pred_region
        %s77 = ssub.s32 %s16, 1
        // Predicated region
        $region13: #{tpu_custom_call.1} parent=11 // pred_check
          %p78 = pneg %p37
        $region14: #{tpu_custom_call.1} parent=11 // pred_check_branch
          %80 = sbr.rel (%p78) target = $region16
        $region15: #{tpu_custom_call.1} parent=11 // pred_region
          %s82 = ssub.s32 384, 384
          %83 = vsyncadd [#allocation5], %s82
          %s84 = sshll.u32 [#allocation4], 4
          %s85 = int_to_ptr.vmem [resolvable:$true] %s84
          %90 = dma.hbm_to_vmem [thread:$0]  %s1, 384, %s85, [#allocation5], 128, 128, 8
        $region16: #{tpu_custom_call.1} parent=11 // pred_fallthru
          _
      $region12: #{tpu_custom_call.1} parent=5 // pred_fallthru
        _
      %p91 = scmp.lt.s32.totalorder %s16, 2
      // Predicated region
      $region17: #{tpu_custom_call.1} parent=5 // pred_check
        %p92 = pneg %p91
      $region18: #{tpu_custom_call.1} parent=5 // pred_check_branch
        %94 = sbr.rel (%p92) target = $region20
      $region19: #{tpu_custom_call.1} parent=5 // pred_region
        _
      $region20: #{tpu_custom_call.1} parent=5 // pred_fallthru
        _
      %p95 = scmp.le.s32.totalorder 1, %s16
      %p96 = scmp.lt.s32.totalorder %s16, 3
      %p97 = pnand %p95, %p96
      %p98 = pneg %p97
      // Predicated region
      $region21: #{tpu_custom_call.1} parent=5 // pred_check
        _
      $region22: #{tpu_custom_call.1} parent=5 // pred_check_branch
        %100 = sbr.rel (%p97) target = $region24
      $region23: #{tpu_custom_call.1} parent=5 // pred_region
        %s101 = ssub.s32 %s16, 1
        // Predicated region
        $region25: #{tpu_custom_call.1} parent=23 // pred_check
          %p102 = pneg %p37
        $region26: #{tpu_custom_call.1} parent=23 // pred_check_branch
          %104 = sbr.rel (%p102) target = $region28
        $region27: #{tpu_custom_call.1} parent=23 // pred_region
          %105 = dma.done [#allocation5], 384
        $region28: #{tpu_custom_call.1} parent=23 // pred_fallthru
          _
        %p106 = pneg %p37
        %p107 = pneg %p34
        %p108 = pneg %p63
        %p109 = pneg %p60
        %s110 = sand.u32 %s50, 1
        %s111 = scalar_lea.sflag [#allocation6], %s110
        %s112 = sand.u32 %s50, 1
        %s113 = smul.addr %s112, 16
        %s114 = scalar_lea.vmem [#allocation7], %s113
        %s115 = smul.u32 2, %s21
        %p116 = scmp.lt.s32.totalorder %s21, 1
        // Predicated region
        $region29: #{tpu_custom_call.1} parent=23 // pred_check
          %p117 = pneg %p116
        $region30: #{tpu_custom_call.1} parent=23 // pred_check_branch
          %119 = sbr.rel (%p117) target = $region32
        $region31: #{tpu_custom_call.1} parent=23 // pred_region
          %s120 = smul.u32 %s21, 16
          %s121 = scalar_lea.vmem [#allocation4], %s120
          %v122 = vld [vmem:[%s121] sm:$0xff]
          %v123 = vld [vmem:[%s121 + $0x8] sm:$0xff]
          %124 = vst [vmem:[%s114] sm:$0xff] %v122
          %125 = vst [vmem:[%s114 + $0x8] sm:$0xff] %v123
        $region32: #{tpu_custom_call.1} parent=23 // pred_fallthru
          _
        %p126 = scmp.eq.s32.totalorder %s21, 1
        // Predicated region
        $region33: #{tpu_custom_call.1} parent=23 // pred_check
          %p127 = pneg %p126
        $region34: #{tpu_custom_call.1} parent=23 // pred_check_branch
          %129 = sbr.rel (%p127) target = $region36
        $region35: #{tpu_custom_call.1} parent=23 // pred_region
          %v130 = vld [vmem:[#allocation4 + $0x10] sm:$0xf]
          %131 = vst [vmem:[%s114] sm:$0xf] %v130
          %s132 = sld [smem:[#allocation3]]
          %s133 = scalar_lea.vmem [#allocation4], %s132
          %v134 = vld [vmem:[%s133] sm:$0x1]
          %s135 = sld [smem:[#allocation3 + $0x1]]
          %s136 = scalar_lea.vmem [#allocation4], %s135
          %v137 = vld [vmem:[%s136] sm:$0x1]
          %v138 = vadd.f32 %v134, %v137
          %v139 = vmul.f32 %v138, 0.5
          %s140 = sld [smem:[#allocation3 + $0x2]]
          %s141 = scalar_lea.vmem [#allocation4], %s140
          %v142 = vld [vmem:[%s141] sm:$0x1]
          %s143 = sld [smem:[#allocation3 + $0x3]]
          %s144 = scalar_lea.vmem [#allocation4], %s143
          %v145 = vld [vmem:[%s144] sm:$0x1]
          %v146 = vadd.f32 %v142, %v145
          %v147 = vmul.f32 %v146, 0.5
          %s148 = sld [smem:[#allocation3 + $0x4]]
          %s149 = scalar_lea.vmem [#allocation4], %s148
          %v150 = vld [vmem:[%s149] sm:$0x1]
          %s151 = sld [smem:[#allocation3 + $0x5]]
          %s152 = scalar_lea.vmem [#allocation4], %s151
          %v153 = vld [vmem:[%s152] sm:$0x1]
          %v154 = vadd.f32 %v150, %v153
          %v155 = vmul.f32 %v154, 0.5
          %s156 = sld [smem:[#allocation3 + $0x6]]
          %s157 = scalar_lea.vmem [#allocation4], %s156
          %v158 = vld [vmem:[%s157] sm:$0x1]
          %s159 = sld [smem:[#allocation3 + $0x7]]
          %s160 = scalar_lea.vmem [#allocation4], %s159
          %v161 = vld [vmem:[%s160] sm:$0x1]
          %v162 = vadd.f32 %v158, %v161
          %v163 = vmul.f32 %v162, 0.5
          %s164 = sld [smem:[#allocation3 + $0x8]]
          %s165 = scalar_lea.vmem [#allocation4], %s164
          %v166 = vld [vmem:[%s165] sm:$0x1]
          %s167 = sld [smem:[#allocation3 + $0x9]]
          %s168 = scalar_lea.vmem [#allocation4], %s167
          %v169 = vld [vmem:[%s168] sm:$0x1]
          %v170 = vadd.f32 %v166, %v169
          %v171 = vmul.f32 %v170, 0.5
          %s172 = sld [smem:[#allocation3 + $0xa]]
          %s173 = scalar_lea.vmem [#allocation4], %s172
          %v174 = vld [vmem:[%s173] sm:$0x1]
          %s175 = sld [smem:[#allocation3 + $0xb]]
          %s176 = scalar_lea.vmem [#allocation4], %s175
          %v177 = vld [vmem:[%s176] sm:$0x1]
          %v178 = vadd.f32 %v174, %v177
          %v179 = vmul.f32 %v178, 0.5
          %s180 = sld [smem:[#allocation3 + $0xc]]
          %s181 = scalar_lea.vmem [#allocation4], %s180
          %v182 = vld [vmem:[%s181] sm:$0x1]
          %s183 = sld [smem:[#allocation3 + $0xd]]
          %s184 = scalar_lea.vmem [#allocation4], %s183
          %v185 = vld [vmem:[%s184] sm:$0x1]
          %v186 = vadd.f32 %v182, %v185
          %v187 = vmul.f32 %v186, 0.5
          %s188 = sld [smem:[#allocation3 + $0xe]]
          %s189 = scalar_lea.vmem [#allocation4], %s188
          %v190 = vld [vmem:[%s189] sm:$0x1]
          %s191 = sld [smem:[#allocation3 + $0xf]]
          %s192 = scalar_lea.vmem [#allocation4], %s191
          %v193 = vld [vmem:[%s192] sm:$0x1]
          %v194 = vadd.f32 %v190, %v193
          %v195 = vmul.f32 %v194, 0.5
          %v197 = vrot.slane %v147, 7
          %v200 = vrot.slane %v155, 6
          %v203 = vrot.slane %v163, 5
          %v206 = vrot.slane %v171, 4
          %v209 = vrot.slane %v179, 3
          %v212 = vrot.slane %v187, 2
          %v215 = vrot.slane %v195, 1
          %vm217 = vcmask 1040384
          %v218 = vsel %vm217, %v139, %v197
          %vm219 = vcmask 1041408
          %v220 = vsel %vm219, %v218, %v200
          %vm221 = vcmask 1042432
          %v222 = vsel %vm221, %v220, %v203
          %vm223 = vcmask 1043456
          %v224 = vsel %vm223, %v222, %v206
          %vm225 = vcmask 1044480
          %v226 = vsel %vm225, %v224, %v209
          %vm227 = vcmask 1045504
          %v228 = vsel %vm227, %v226, %v212
          %vm229 = vcmask 1046528
          %v230 = vsel %vm229, %v228, %v215
          %231 = vst [vmem:[%s114 + $0x4] sm:$0xff] %v230
        $region36: #{tpu_custom_call.1} parent=23 // pred_fallthru
          _
        %s232 = sand.u32 %s50, 1
        %s233 = scalar_lea.sflag [#allocation6], %s232
        %s234 = sand.u32 %s50, 1
        %s235 = smul.addr %s234, 16
        %s236 = scalar_lea.vmem [#allocation7], %s235
        // Predicated region
        $region37: #{tpu_custom_call.1} parent=23 // pred_check
          %p237 = pneg %p60
        $region38: #{tpu_custom_call.1} parent=23 // pred_check_branch
          %239 = sbr.rel (%p237) target = $region40
        $region39: #{tpu_custom_call.1} parent=23 // pred_region
          %s240 = smul.u32 2, %s21
          %s242 = ssub.s32 256, 256
          %243 = vsyncadd %s233, %s242
          %s244 = smul.addr %s240, 128
          %s245 = scalar_lea.hbm %s2, %s244
          %s246 = sshll.u32 %s236, 4
          %s247 = int_to_ptr.vmem [resolvable:$true] %s246
          %252 = dma.vmem_to_hbm [thread:$0]  %s247, 256, %s245, %s233, 128, 128, 8
        $region40: #{tpu_custom_call.1} parent=23 // pred_fallthru
          _
      $region24: #{tpu_custom_call.1} parent=5 // pred_fallthru
        _
      %p253 = scmp.le.s32.totalorder 2, %s16
      // Predicated region
      $region41: #{tpu_custom_call.1} parent=5 // pred_check
        %p254 = pneg %p253
      $region42: #{tpu_custom_call.1} parent=5 // pred_check_branch
        %256 = sbr.rel (%p254) target = $region44
      $region43: #{tpu_custom_call.1} parent=5 // pred_region
        %s257 = ssub.s32 %s16, 2
        // Predicated region
        $region45: #{tpu_custom_call.1} parent=43 // pred_check
          %p258 = pneg %p66
        $region46: #{tpu_custom_call.1} parent=43 // pred_check_branch
          %260 = sbr.rel (%p258) target = $region48
        $region47: #{tpu_custom_call.1} parent=43 // pred_region
          %s261 = sand.u32 %s51, 1
          %s262 = scalar_lea.sflag [#allocation6], %s261
          %s263 = sand.u32 %s51, 1
          %s264 = smul.addr %s263, 16
          %s265 = scalar_lea.vmem [#allocation7], %s264
          %266 = dma.done %s262, 256
        $region48: #{tpu_custom_call.1} parent=43 // pred_fallthru
          _
      $region44: #{tpu_custom_call.1} parent=5 // pred_fallthru
        _
    $region6: #{tpu_custom_call.1} parent=1 // loop_footer
      %s20 = sadd.s32 1, %s16
    $region7: #{tpu_custom_call.1} parent=1 // loop_footer_branch
      %15 = sbr.rel target = $region3
    $region8: #{tpu_custom_call.1} parent=1 // loop_exit
      _
    %267 = vsyncpa [#allocation5], 1
    %s268 = scalar_lea.sflag [#allocation5], 1
    %269 = vsyncpa %s268, 1
    %270 = vsyncpa [#allocation6], 1
    %s271 = scalar_lea.sflag [#allocation6], 1
    %272 = vsyncpa %s271, 1

</llo_original>
